<compile_context>
chip_gen: v5e
topology: v5e:2x2
jax: 0.10.0
libtpu: 0.0.40
codegen_flags: <defaults>
</compile_context>

<pallas_src>
import math

import jax
import jax.numpy as jnp
from jax.experimental import pallas as pl
from jax.experimental.pallas import tpu as pltpu


def generate_filter(start, end, size):
    return [[0.0 if i + j > end or i + j <= start else 1.0 for j in range(size)]
            for i in range(size)]


def _filter_mul_kernel(x_ref, filt_ref, o_ref):
    # x_ref: (TB, lane), filt_ref: (1, lane) -> free sublane broadcast on the VPU.
    o_ref[...] = (x_ref[...] * filt_ref[...]).astype(o_ref.dtype)


def _round_up(v, m):
    return -(-v // m) * m


def _round_down(v, m):
    return max(m, (v // m) * m)


def filter_forward(x, base, learnable=None, *, use_learnable=True,
                   norm=False, ft_num=None):
    """Pallas implementation of Filter.forward.

    x:         [B, C, size, size]  (NCHW)
    base:      [size, size]        fixed band-pass mask (non-trainable)
    learnable: [size, size]        learnable residual (use_learnable=True)
    """
    B, C, H, W = x.shape
    size = H
    assert H == W == base.shape[0] == base.shape[1]

    # --- filter construction: tiny parameter math, done once in f32 ---
    filt = base.astype(jnp.float32)
    if use_learnable:
        assert learnable is not None
        filt = filt + (2.0 * jax.nn.sigmoid(learnable.astype(jnp.float32)) - 1.0)
    if norm:
        filt = filt / jnp.float32(ft_num)

    hw = size * size
    rows = B * C

    # --- lane-dense layout: make the last dim a multiple of 128 if possible
    #     by folding k rows into the lane dim and tiling the filter row. ---
    k = 128 // math.gcd(hw, 128)
    if k > 1 and rows % k == 0:
        lane = hw * k
        n_rows = rows // k
        filt_row = jnp.tile(filt.reshape(1, hw), (1, k))
    else:
        lane = hw
        n_rows = rows
        filt_row = filt.reshape(1, hw)

    # Keep the in-kernel multiply in bf16 when activations are bf16
    # (bf16 VALU on v6e/v7x; halves vreg footprint).
    if x.dtype == jnp.bfloat16:
        filt_row = filt_row.astype(jnp.bfloat16)

    x_flat = x.reshape(n_rows, lane)

    # --- tile selection ---
    itemsize = jnp.dtype(x.dtype).itemsize
    # dtype-dependent sublane packing: 8 (f32), 16 (bf16), 32 (int8/fp8).
    sublane = max(8, 32 // itemsize)
    # ~4 MiB tiles -> (2 in-bufs + 2 out-bufs) ~ 16 MiB, inside the 32 MiB
    # scoped-VMEM limit requested below on every generation.
    target_bytes = 4 * 1024 * 1024
    row_bytes = lane * itemsize
    tb = _round_down(max(1, target_bytes // row_bytes), sublane)

    total_bytes = n_rows * row_bytes
    if total_bytes > 4 * 1024 * 1024:
        # Guarantee >= 2 grid programs so "parallel" can shard rows across
        # v7x's two TensorCores (each TC has its own DMA streams).
        half = _round_up(pl.cdiv(n_rows, 2), sublane)
        if half < n_rows:
            tb = min(tb, half)
    if n_rows <= tb:
        tb = n_rows  # single grid step; full-dim block satisfies (8,128) rule

    grid = (pl.cdiv(n_rows, tb),)

    cost = pl.CostEstimate(
        flops=rows * hw,
        transcendentals=0,
        bytes_accessed=2 * n_rows * row_bytes
        + lane * jnp.dtype(filt_row.dtype).itemsize,
    )

    out = pl.pallas_call(
        _filter_mul_kernel,
        out_shape=jax.ShapeDtypeStruct((n_rows, lane), x.dtype),
        grid_spec=pltpu.PrefetchScalarGridSpec(
            num_scalar_prefetch=0,
            grid=grid,
            in_specs=[
                # NOTE: if profiling large row counts shows exposed DMA,
                # try pipeline_mode=pl.Buffered(3) here (sweep 2 vs 3).
                pl.BlockSpec((tb, lane), lambda i: (i, 0)),
                pl.BlockSpec((1, lane), lambda i: (0, 0)),
            ],
            out_specs=pl.BlockSpec((tb, lane), lambda i: (i, 0)),
        ),
        compiler_params=pltpu.CompilerParams(
            dimension_semantics=("parallel",),
            vmem_limit_bytes=32 << 20,
        ),
        cost_estimate=cost,
    )(x_flat, filt_row)

    return out.reshape(B, C, size, size)


if __name__ == "__main__":
    # Module config (defaults: use_learnable=True, norm=False)
    size = 16
    band_start, band_end = 0, 8
    B, C = 2, 4

    key = jax.random.PRNGKey(0)
    k_x, k_learn, k_x8, k_learn8 = jax.random.split(key, 4)

    # Deterministic parameter init (synthetic; mirrors __init__ shapes).
    base = jnp.asarray(generate_filter(band_start, band_end, size),
                       dtype=jnp.float32)                       # [size, size]
    learnable = 0.1 * jax.random.normal(k_learn, (size, size),
                                        dtype=jnp.float32)      # N(0, 0.1)
    ft_num = float(jnp.sum(base))                               # used if norm=True

    x = jax.random.normal(k_x, (B, C, size, size), dtype=jnp.float32)

    # norm=False path (module default)
    y = filter_forward(x, base, learnable, use_learnable=True,
                       norm=False, ft_num=ft_num)
    y = jax.block_until_ready(y)

    # Pure-JAX reference.
    filt_ref = base + (2.0 * jax.nn.sigmoid(learnable) - 1.0)
    y_ref = x * filt_ref
    assert y.shape == (B, C, size, size)
    assert jnp.allclose(y, y_ref, atol=1e-6, rtol=1e-6)

    # norm=True path sanity check.
    y2 = filter_forward(x, base, learnable, use_learnable=True,
                        norm=True, ft_num=ft_num)
    y2 = jax.block_until_ready(y2)
    y2_ref = x * filt_ref / ft_num
    assert jnp.allclose(y2, y2_ref, atol=1e-6, rtol=1e-6)

    # size=8 path exercises the lane-folding guard (hw=64 -> lane=128).
    size8 = 8
    base8 = jnp.asarray(generate_filter(0, 4, size8), dtype=jnp.float32)
    learnable8 = 0.1 * jax.random.normal(k_learn8, (size8, size8),
                                         dtype=jnp.float32)
    x8 = jax.random.normal(k_x8, (B, C, size8, size8), dtype=jnp.float32)
    y8 = filter_forward(x8, base8, learnable8, use_learnable=True,
                        norm=False, ft_num=None)
    y8 = jax.block_until_ready(y8)
    filt8_ref = base8 + (2.0 * jax.nn.sigmoid(learnable8) - 1.0)
    assert jnp.allclose(y8, x8 * filt8_ref, atol=1e-6, rtol=1e-6)

    print("KERNEL_OK")
</pallas_src>

<mosaic_0001>
module attributes {stable_mosaic.version = 11 : i64} {
  func.func @_filter_mul_kernel(%arg0: i32, %arg1: memref<8x256xf32, #tpu.memory_space<vmem>>, %arg2: memref<1x256xf32, #tpu.memory_space<vmem>>, %arg3: memref<8x256xf32, #tpu.memory_space<vmem>>) attributes {dimension_semantics = [#tpu.dimension_semantics<parallel>], iteration_bounds = array<i64: 1>, scalar_prefetch = 0 : i64, scratch_operands = 0 : i64, tpu.core_type = #tpu.core_type<tc>, window_params = [{transform_indices = @transform_0, window_bounds = array<i64: 8, 256>}, {pipeline_mode = #tpu.pipeline_mode<synchronous>, transform_indices = @transform_1, window_bounds = array<i64: 1, 256>}, {transform_indices = @transform_2, window_bounds = array<i64: 8, 256>}]} {
    %c0 = arith.constant 0 : index
    %c0_0 = arith.constant 0 : index
    %0 = vector.load %arg1[%c0, %c0_0] : memref<8x256xf32, #tpu.memory_space<vmem>>, vector<8x256xf32>
    %c0_1 = arith.constant 0 : index
    %c0_2 = arith.constant 0 : index
    %1 = vector.load %arg2[%c0_1, %c0_2] : memref<1x256xf32, #tpu.memory_space<vmem>>, vector<1x256xf32>
    %2 = vector.broadcast %1 : vector<1x256xf32> to vector<8x256xf32>
    %3 = arith.mulf %0, %2 : vector<8x256xf32>
    %c0_3 = arith.constant 0 : index
    %c0_4 = arith.constant 0 : index
    %4 = vector.load %arg3[%c0_3, %c0_4] : memref<8x256xf32, #tpu.memory_space<vmem>>, vector<8x256xf32>
    tpu.vector_store %arg3[%c0_3, %c0_4], %3 {strides = array<i32>} : memref<8x256xf32, #tpu.memory_space<vmem>>, vector<8x256xf32>,
    return
  }
  func.func @transform_0(%arg0: i32) -> (i32, i32) {
    %c0_i32 = arith.constant 0 : i32
    %c0_i32_0 = arith.constant 0 : i32
    return %arg0, %c0_i32 : i32, i32
  }
  func.func @transform_1(%arg0: i32) -> (i32, i32) {
    %c0_i32 = arith.constant 0 : i32
    %c0_i32_0 = arith.constant 0 : i32
    %c0_i32_1 = arith.constant 0 : i32
    return %c0_i32, %c0_i32_0 : i32, i32
  }
  func.func @transform_2(%arg0: i32) -> (i32, i32) {
    %c0_i32 = arith.constant 0 : i32
    %c0_i32_0 = arith.constant 0 : i32
    return %arg0, %c0_i32 : i32, i32
  }
}

</mosaic_0001>

<llo_original>
// kernel: tpu_custom_call.1
$region0: #{tpu_custom_call.1}
  #allocation0 [shape = 'u32[]', space=smem, size = 0x4, offset = 0x4, fixed_abs, tag = 'smem constant byte address 0x4 - core index']
  #allocation1 [shape = 'u32[72,128]{1,0:T(1,128)}', space=vmem, size = 0x9000, scoped, tag = 'internal scratch']
  %s0 = inlined_call_operand.hbm [shape: f32[8,256], index: 0, kind: input, shape index: {}]
  %s1 = inlined_call_operand.hbm [shape: f32[1,256], index: 1, kind: input, shape index: {}]
  %s2 = inlined_call_operand.hbm [shape: f32[8,256], index: 2, kind: output, shape index: {}]
  %s3 = sld [smem:[#allocation0]]
  $region26: #{tpu_custom_call.1} parent=0
    _
  %s5 = ssub.s32 1, %s3
  %s6 = scalar_select 0, %s5, %s3
  $region1: #{tpu_custom_call.1} parent=0
    #allocation2 [shape = 'u8[8192]{0}', space=vmem, size = 0x2000, scoped, tag = 'input window, operand 0, single buffered']
    #allocation3 [shape = 's32[1]{0}', space=sflag, size = 0x4, scoped, tag = 'scoped memory for tpu_custom_call.1']
    #allocation4 [shape = 's32[1]{0}', space=sflag, size = 0x4, scoped, tag = 'scoped memory for tpu_custom_call.1']
    #allocation5 [shape = 'u8[1024]{0}', space=vmem, size = 0x400, scoped, tag = 'input window, operand 1, single buffered']
    #allocation6 [shape = 's32[1]{0}', space=sflag, size = 0x4, scoped, tag = 'scoped memory for tpu_custom_call.1']
    #allocation7 [shape = 'u8[8192]{0}', space=vmem, size = 0x2000, scoped, tag = 'output window, operand 0, single buffered']
    %7 = vsyncpa [#allocation3], 0
    %8 = vsyncpa [#allocation6], 0
    %9 = vsyncpa [#allocation4], 0
    // Predicated region
    $region2: #{tpu_custom_call.1} parent=1 // pred_check
      _
    $region3: #{tpu_custom_call.1} parent=1 // pred_check_branch
      %11 = sbr.rel (0) target = $region5
    $region4: #{tpu_custom_call.1} parent=1 // pred_region
      %13 = vsyncadd [#allocation3], 0
      %s15 = sshll.u32 %s0, 4
      %s16 = int_to_ptr.hbm [resolvable:$true] %s15
      %s17 = sshll.u32 [#allocation2], 4
      %s18 = int_to_ptr.vmem [resolvable:$true] %s17
      %20 = dma.hbm_to_vmem [thread:$0]  %s16, 256, %s18, [#allocation3]
    $region5: #{tpu_custom_call.1} parent=1 // pred_fallthru
      _
    // Predicated region
    $region6: #{tpu_custom_call.1} parent=1 // pred_check
      _
    $region7: #{tpu_custom_call.1} parent=1 // pred_check_branch
      %22 = sbr.rel (0) target = $region9
    $region8: #{tpu_custom_call.1} parent=1 // pred_region
      %24 = vsyncadd [#allocation6], 0
      %s26 = sshll.u32 %s1, 4
      %s27 = int_to_ptr.hbm [resolvable:$true] %s26
      %s28 = sshll.u32 [#allocation5], 4
      %s29 = int_to_ptr.vmem [resolvable:$true] %s28
      %31 = dma.hbm_to_vmem [thread:$0]  %s27, 32, %s29, [#allocation6]
    $region9: #{tpu_custom_call.1} parent=1 // pred_fallthru
      _
    // Predicated region
    $region10: #{tpu_custom_call.1} parent=1 // pred_check
      _
    $region11: #{tpu_custom_call.1} parent=1 // pred_check_branch
      %33 = sbr.rel (0) target = $region13
    $region12: #{tpu_custom_call.1} parent=1 // pred_region
      %35 = dma.done [#allocation3], 256
    $region13: #{tpu_custom_call.1} parent=1 // pred_fallthru
      _
    // Predicated region
    $region14: #{tpu_custom_call.1} parent=1 // pred_check
      _
    $region15: #{tpu_custom_call.1} parent=1 // pred_check_branch
      %37 = sbr.rel (0) target = $region17
    $region16: #{tpu_custom_call.1} parent=1 // pred_region
      %39 = dma.done [#allocation6], 32
    $region17: #{tpu_custom_call.1} parent=1 // pred_fallthru
      _
    %v40 = vld [vmem:[#allocation2] sm:$0xff]
    %v41 = vld [vmem:[#allocation2 + $0x8] sm:$0xff]
    %v42 = vld [vmem:[#allocation5] sm:$0x3]
    %v44 = vperm.slane %v42, 0
    %v45 = vperm.slane %v42, 1
    %v48 = vmul.f32 %v40, %v44
    %v49 = vmul.f32 %v41, %v45
    %50 = vst [vmem:[#allocation7] sm:$0xff] %v48
    %51 = vst [vmem:[#allocation7 + $0x8] sm:$0xff] %v49
    // Predicated region
    $region18: #{tpu_custom_call.1} parent=1 // pred_check
      _
    $region19: #{tpu_custom_call.1} parent=1 // pred_check_branch
      %53 = sbr.rel (0) target = $region21
    $region20: #{tpu_custom_call.1} parent=1 // pred_region
      %55 = vsyncadd [#allocation4], 0
      %s57 = sshll.u32 [#allocation7], 4
      %s58 = int_to_ptr.vmem [resolvable:$true] %s57
      %s59 = sshll.u32 %s2, 4
      %s60 = int_to_ptr.hbm [resolvable:$true] %s59
      %62 = dma.vmem_to_hbm [thread:$0]  %s58, 256, %s60, [#allocation4]
    $region21: #{tpu_custom_call.1} parent=1 // pred_fallthru
      _
    // Predicated region
    $region22: #{tpu_custom_call.1} parent=1 // pred_check
      _
    $region23: #{tpu_custom_call.1} parent=1 // pred_check_branch
      %64 = sbr.rel (0) target = $region25
    $region24: #{tpu_custom_call.1} parent=1 // pred_region
      %66 = dma.done [#allocation4], 256
    $region25: #{tpu_custom_call.1} parent=1 // pred_fallthru
      _
    %67 = vsyncpa [#allocation3], 1
    %68 = vsyncpa [#allocation6], 1
    %69 = vsyncpa [#allocation4], 1

</llo_original>
